<compile_context>
chip_gen: v7x
topology: tpu7x:2x2x1
jax: 0.10.0
libtpu: 0.0.40
codegen_flags: <defaults>
</compile_context>

<pallas_src>
import functools

import numpy as np

import jax
import jax.numpy as jnp
from jax import lax
from jax.experimental import pallas as pl
from jax.experimental.pallas import tpu as pltpu


def to_pair(v):
    if isinstance(v, (tuple, list)):
        assert len(v) == 2
        return (int(v[0]), int(v[1]))
    return (int(v), int(v))


def _cdiv(a, b):
    return (a + b - 1) // b


def _round_up(a, m):
    return ((a + m - 1) // m) * m


def _next_pow2(v):
    return 1 << (int(v) - 1).bit_length()


def _pad_min(dtype):
    """A value that never wins a max for this dtype (used as pad fill)."""
    dtype = jnp.dtype(dtype)
    if dtype == jnp.bool_:
        return False
    if jnp.issubdtype(dtype, jnp.floating):
        return -jnp.inf
    return int(jnp.iinfo(dtype).min)


def _vmem_capacity_bytes():
    try:
        return int(pltpu.get_tpu_info().vmem_capacity_bytes)
    except Exception:
        return 64 * 1024 * 1024  # assume the smallest generation (v7x) if unknown


def _pick_nb(n, in_plane_bytes, out_plane_bytes, in_plane_elems, sub_mult):
    """Planes per grid step + scoped-VMEM limit, sized from physical VMEM."""
    vmem_cap = _vmem_capacity_bytes()
    # Scoped VMEM handed to Mosaic: half of physical (64 MiB v5e/v6e, 32 MiB v7x).
    vmem_limit = min(vmem_cap // 2, 96 * 1024 * 1024)
    # Rough per-plane VMEM bill: 2x double-buffered input + 2x double-buffered
    # output + ~4 block-sized compute temporaries (window max / compaction).
    per_plane = 2 * in_plane_bytes + 2 * out_plane_bytes + 4 * in_plane_elems * 4
    budget = vmem_limit // 2  # headroom: the estimate above is rough
    nb = max(1, budget // max(1, per_plane))
    if nb >= n:
        # Whole problem in one step; do not split small problems (pure per-step
        # overhead on single-TC v5e/v6e; only costs an idle core on v7x for
        # problems that are tiny anyway).
        return n, vmem_limit
    nb = max(sub_mult, (nb // sub_mult) * sub_mult)
    # Prefer an even number of grid steps (v7x shards the "parallel" axis over
    # 2 TensorCores) when it does not shrink blocks much.
    steps = _cdiv(n, nb)
    if steps > 1 and steps % 2 == 1:
        nb_even = max(sub_mult, _round_up(_cdiv(n, steps + 1), sub_mult))
        if _cdiv(n, nb_even) % 2 == 0:
            nb = nb_even
    return min(nb, n), vmem_limit


# ---------------------------------------------------------------------------
# Fast path: flattened lane-dense planes (padded W < 128).
# ---------------------------------------------------------------------------

def _flat_selector(L, wp2, wo, ho, sw, sh):
    """Static per-lane selector bits for the shift/select compactions.

    bits [0, nbits_a)           : bits of (lane mod wp2)   -> W-stride pass
    bits [nbits_a, nbits_a+nbm) : binary row-merge masks   -> H-stride/pitch pass
    """
    p = np.arange(L, dtype=np.int64)
    sel = np.zeros(L, dtype=np.int64)
    nbits_a = (wo - 1).bit_length() if (sw > 1 and wo > 1) else 0
    if nbits_a:
        sel |= (p % wp2) & ((1 << nbits_a) - 1)
    group0 = sh * wp2
    nbits_m = (ho - 1).bit_length() if (ho > 1 and group0 != wo) else 0
    for b in range(nbits_m):
        q = p % ((2 << b) * group0)
        m = (q >= (1 << b) * wo) & (q < (2 << b) * wo)
        sel |= m.astype(np.int64) << (nbits_a + b)
    assert nbits_a + nbits_m <= 31, "pooling output too large for selector word"
    return sel.astype(np.int32).reshape(1, L), nbits_a, nbits_m


def _maxpool_flat_kernel(x_ref, sel_ref, o_ref, *, kh, kw, sw, wp2, howo,
                         nbits_a, nbits_m, merge_shift0):
    """Max-pool a block of flattened planes.

    x_ref:   (nb, L)      flattened (already padded) planes, L = hp2*wp2
    sel_ref: (1, L) int32 static selector bits (see _flat_selector)
    o_ref:   (nb, Ho*Wo)  flattened pooled planes
    """
    L = x_ref.shape[1]
    x = x_ref[...]

    # Separable window max (XLU lane rolls): result[p] = src[p + a] via
    # pltpu.roll(src, shift=L - a).
    acc = x
    for dh in range(1, kh):
        acc = jnp.maximum(acc, pltpu.roll(x, shift=L - dh * wp2, axis=1))
    wacc = acc
    for dw in range(1, kw):
        wacc = jnp.maximum(wacc, pltpu.roll(acc, shift=L - dw, axis=1))
    # wacc[r*wp2 + c] = max over the kh x kw window with top-left (r, c).

    cur = wacc
    sel = sel_ref[...]

    # Pass A: within-row W-stride compaction.
    # dest lane r*wp2 + j  <-  wacc[r*wp2 + j*sw]   (exact; stays in-row)
    for b in range(nbits_a):
        step = (1 << b) * (sw - 1)
        shifted = pltpu.roll(cur, shift=L - step, axis=1)
        take = ((sel >> b) & 1) != 0
        cur = jnp.where(take, shifted, cur)

    # Pass B: binary row merge — applies the H stride and squeezes the row
    # pitch from sh*wp2 down to wo, leaving all Ho*Wo outputs contiguous at
    # lane 0.  dest lane i*wo + j  <-  (row i*sh data) for i < Ho.
    for b in range(nbits_m):
        step = (1 << b) * merge_shift0
        shifted = pltpu.roll(cur, shift=L - step, axis=1)
        take = ((sel >> (nbits_a + b)) & 1) != 0
        cur = jnp.where(take, shifted, cur)

    o_ref[...] = cur[:, :howo].astype(o_ref.dtype)


# ---------------------------------------------------------------------------
# General path: (N, H, W) planes, W >= 128 (already lane-dense enough).
# ---------------------------------------------------------------------------

def _maxpool_2d_kernel(x_ref, o_ref, *, kh, kw, sh, sw, ho, wo):
    """x_ref: (nb, H, W) padded planes; o_ref: (nb, Ho, Wo)."""
    _, _, w = x_ref.shape

    # H window + H stride folded into kh strided row reads.
    def h_rows(dh):
        if sh > 1:
            return x_ref[:, pl.ds(dh, ho, stride=sh), :]
        return x_ref[:, pl.ds(dh, ho), :]

    acc = h_rows(0)
    for dh in range(1, kh):
        acc = jnp.maximum(acc, h_rows(dh))

    # W window via lane rolls (separable).
    wacc = acc
    for dw in range(1, kw):
        wacc = jnp.maximum(wacc, pltpu.roll(acc, shift=w - dw, axis=2))

    # W stride: exact shift/select compaction, selector from a (1,1,W) iota.
    cur = wacc
    if sw > 1 and wo > 1:
        col = lax.broadcasted_iota(jnp.int32, (1, 1, w), 2)
        for b in range((wo - 1).bit_length()):
            step = (1 << b) * (sw - 1)
            shifted = pltpu.roll(cur, shift=w - step, axis=2)
            take = ((col >> b) & 1) != 0
            cur = jnp.where(take, shifted, cur)

    o_ref[...] = cur[:, :, :wo].astype(o_ref.dtype)


# ---------------------------------------------------------------------------
# Wrapper
# ---------------------------------------------------------------------------

def pooling(x, kernel_size, stride=None, padding=0):
    """JAX/Pallas equivalent of SpykeTorch sf.pooling (F.max_pool2d, floor mode)."""
    kh, kw = to_pair(kernel_size)
    sh, sw = to_pair(stride) if stride is not None else (kh, kw)
    ph, pw = to_pair(padding)

    t, c, h, w = x.shape
    hp, wp = h + 2 * ph, w + 2 * pw
    assert hp >= kh and wp >= kw, "pooling window larger than (padded) input"
    ho = (hp - kh) // sh + 1
    wo = (wp - kw) // sw + 1

    n = t * c
    itemsize = jnp.dtype(x.dtype).itemsize
    flops = int(n * ho * wo * kh * kw)

    # ---- small-plane fast path: flattened, lane-dense planes -------------
    use_flat = (wp < 128) and (bool(ph or pw) or (hp * wp) % 128 == 0)
    if use_flat:
        if ph or pw:
            # Pad to "nice" dims so the flattened plane length is a multiple of
            # 128 lanes.  Extra rows/cols beyond (hp, wp) are never touched by
            # any valid window; requested padding uses a value that never wins
            # the max.
            wp2 = _next_pow2(wp)                  # divisor of 128 (wp < 128)
            hp2 = _round_up(hp, 128 // wp2)
        else:
            wp2, hp2 = wp, hp                     # already 128-aligned, free
        L = hp2 * wp2
        howo = ho * wo

        xr = x.reshape(n, h, w)
        if ph or pw:
            # TODO(synk): fold the (rare) padded case into the kernel with a
            # border mask to save this extra HBM pass.
            xr = jnp.pad(xr, ((0, 0), (ph, hp2 - h - ph), (pw, wp2 - w - pw)),
                         constant_values=_pad_min(x.dtype))
        xr = xr.reshape(n, L)                     # free: memory already contiguous

        sel_np, nbits_a, nbits_m = _flat_selector(L, wp2, wo, ho, sw, sh)
        sel = jnp.asarray(sel_np)                 # tiny static (1, L) int32

        sub_mult = max(8, 32 // max(1, itemsize))  # sublane tile multiple per dtype
        nb, vmem_limit = _pick_nb(n, L * itemsize, howo * itemsize, L, sub_mult)

        kernel = functools.partial(
            _maxpool_flat_kernel, kh=kh, kw=kw, sw=sw, wp2=wp2, howo=howo,
            nbits_a=nbits_a, nbits_m=nbits_m, merge_shift0=sh * wp2 - wo)

        out = pl.pallas_call(
            kernel,
            out_shape=jax.ShapeDtypeStruct((n, howo), x.dtype),
            grid=(_cdiv(n, nb),),
            in_specs=[pl.BlockSpec((nb, L), lambda i: (i, 0)),
                      pl.BlockSpec((1, L), lambda i: (0, 0))],
            out_specs=pl.BlockSpec((nb, howo), lambda i: (i, 0)),
            compiler_params=pltpu.CompilerParams(
                dimension_semantics=("parallel",),
                vmem_limit_bytes=vmem_limit),
            cost_estimate=pl.CostEstimate(
                flops=flops, transcendentals=0,
                bytes_accessed=int((n * L + n * howo) * itemsize)),
        )(xr, sel)
        return out.reshape(t, c, ho, wo)

    # ---- general path: planes already lane-dense as (H, W) ---------------
    # TODO(synk): for small W with H*W not 128-aligned and no padding, this
    # path is lane-sparse; padding to aligned dims (one extra HBM pass) or an
    # H-tiled flat variant would recover lane density.
    xr = x.reshape(n, h, w)
    if ph or pw:
        xr = jnp.pad(xr, ((0, 0), (ph, ph), (pw, pw)),
                     constant_values=_pad_min(x.dtype))

    nb, vmem_limit = _pick_nb(n, hp * wp * itemsize, ho * wo * itemsize,
                              hp * wp, 1)
    kernel = functools.partial(_maxpool_2d_kernel, kh=kh, kw=kw, sh=sh, sw=sw,
                               ho=ho, wo=wo)
    out = pl.pallas_call(
        kernel,
        out_shape=jax.ShapeDtypeStruct((n, ho, wo), x.dtype),
        grid=(_cdiv(n, nb),),
        in_specs=[pl.BlockSpec((nb, hp, wp), lambda i: (i, 0, 0))],
        out_specs=pl.BlockSpec((nb, ho, wo), lambda i: (i, 0, 0)),
        compiler_params=pltpu.CompilerParams(
            dimension_semantics=("parallel",),
            vmem_limit_bytes=vmem_limit),
        cost_estimate=pl.CostEstimate(
            flops=flops, transcendentals=0,
            bytes_accessed=int((n * hp * wp + n * ho * wo) * itemsize)),
    )(xr)
    return out.reshape(t, c, ho, wo)


class Pooling:
    """JAX/Pallas counterpart of the PyTorch `Pooling` module (no parameters)."""

    def __init__(self, kernel_size, stride=None, padding=0):
        self.kernel_size = to_pair(kernel_size)
        self.stride = self.kernel_size if stride is None else to_pair(stride)
        self.padding = to_pair(padding)

    def __call__(self, x):
        return pooling(x, self.kernel_size, self.stride, self.padding)


def _ref_pool(x, kernel_size, stride=None, padding=0):
    """Pure-JAX reference with F.max_pool2d (floor-mode) semantics."""
    kh, kw = to_pair(kernel_size)
    sh, sw = to_pair(stride) if stride is not None else (kh, kw)
    ph, pw = to_pair(padding)
    if jnp.issubdtype(x.dtype, jnp.floating):
        init = -jnp.inf
    else:
        init = jnp.asarray(_pad_min(x.dtype), x.dtype)
    return lax.reduce_window(
        x, init, lax.max,
        window_dimensions=(1, 1, kh, kw),
        window_strides=(1, 1, sh, sw),
        padding=((0, 0), (0, 0), (ph, ph), (pw, pw)))


if __name__ == "__main__":
    key = jax.random.PRNGKey(0)
    # (T=2 time steps, C=4 feature maps, H=16, W=16)
    x = jax.random.uniform(key, (2, 4, 16, 16), dtype=jnp.float32)

    # 1) Default SpykeTorch pooling: kernel 2, full stride, no padding (flat path).
    y = jax.block_until_ready(Pooling(kernel_size=2)(x))
    assert y.shape == (2, 4, 8, 8), y.shape
    assert jnp.array_equal(y, _ref_pool(x, 2)), "mismatch (k=2, s=2, p=0)"

    # 2) Overlapping windows: kernel 3, stride 2 (flat path, non-pow2 output).
    y2 = jax.block_until_ready(Pooling(kernel_size=3, stride=2)(x))
    assert y2.shape == (2, 4, 7, 7), y2.shape
    assert jnp.array_equal(y2, _ref_pool(x, 3, 2)), "mismatch (k=3, s=2, p=0)"

    # 3) Padded: kernel 2, stride 2, padding 1 (flat path with aligned padding).
    y3 = jax.block_until_ready(Pooling(kernel_size=2, stride=2, padding=1)(x))
    assert y3.shape == (2, 4, 9, 9), y3.shape
    assert jnp.array_equal(y3, _ref_pool(x, 2, 2, 1)), "mismatch (k=2, s=2, p=1)"

    # 4) Wide planes (W=128): exercises the general (N, H, W) path.
    x4 = jax.random.uniform(jax.random.PRNGKey(1), (1, 2, 16, 128),
                            dtype=jnp.float32)
    y4 = jax.block_until_ready(Pooling(kernel_size=2)(x4))
    assert y4.shape == (1, 2, 8, 64), y4.shape
    assert jnp.array_equal(y4, _ref_pool(x4, 2)), "mismatch (wide, k=2)"

    # 5) Flat path with a non-power-of-two plane width (W=24, 16*24 % 128 == 0).
    x5 = jax.random.uniform(jax.random.PRNGKey(2), (1, 2, 16, 24),
                            dtype=jnp.float32)
    y5 = jax.block_until_ready(Pooling(kernel_size=2)(x5))
    assert y5.shape == (1, 2, 8, 12), y5.shape
    assert jnp.array_equal(y5, _ref_pool(x5, 2)), "mismatch (W=24, k=2)"

    print("KERNEL_OK")
</pallas_src>

<mosaic_0001>
module attributes {stable_mosaic.version = 11 : i64} {
  func.func @_maxpool_flat_kernel(%arg0: i32, %arg1: memref<8x256xf32, #tpu.memory_space<vmem>>, %arg2: memref<1x256xi32, #tpu.memory_space<vmem>>, %arg3: memref<8x64xf32, #tpu.memory_space<vmem>>) attributes {dimension_semantics = [#tpu.dimension_semantics<parallel>], iteration_bounds = array<i64: 1>, scalar_prefetch = 0 : i64, scratch_operands = 0 : i64, tpu.core_type = #tpu.core_type<tc>, window_params = [{transform_indices = @transform_0, window_bounds = array<i64: 8, 256>}, {pipeline_mode = #tpu.pipeline_mode<synchronous>, transform_indices = @transform_1, window_bounds = array<i64: 1, 256>}, {transform_indices = @transform_2, window_bounds = array<i64: 8, 64>}]} {
    %c0 = arith.constant 0 : index
    %c0_0 = arith.constant 0 : index
    %0 = vector.load %arg1[%c0, %c0_0] : memref<8x256xf32, #tpu.memory_space<vmem>>, vector<8x256xf32>
    %c240_i32 = arith.constant 240 : i32
    %1 = tpu.dynamic_rotate %0 by %c240_i32 dim 1 : vector<8x256xf32>, i32 -> vector<8x256xf32>
    %2 = arith.maximumf %0, %1 : vector<8x256xf32>
    %c255_i32 = arith.constant 255 : i32
    %3 = tpu.dynamic_rotate %2 by %c255_i32 dim 1 : vector<8x256xf32>, i32 -> vector<8x256xf32>
    %4 = arith.maximumf %2, %3 : vector<8x256xf32>
    %c0_1 = arith.constant 0 : index
    %c0_2 = arith.constant 0 : index
    %5 = vector.load %arg2[%c0_1, %c0_2] : memref<1x256xi32, #tpu.memory_space<vmem>>, vector<1x256xi32>
    %c255_i32_3 = arith.constant 255 : i32
    %6 = tpu.dynamic_rotate %4 by %c255_i32_3 dim 1 : vector<8x256xf32>, i32 -> vector<8x256xf32>
    %c0_i32 = arith.constant 0 : i32
    %7 = vector.broadcast %c0_i32 : i32 to vector<1x256xi32>
    %8 = arith.shrsi %5, %7 : vector<1x256xi32>
    %c1_i32 = arith.constant 1 : i32
    %9 = vector.broadcast %c1_i32 : i32 to vector<1x256xi32>
    %10 = arith.andi %8, %9 : vector<1x256xi32>
    %c0_i32_4 = arith.constant 0 : i32
    %11 = vector.broadcast %c0_i32_4 : i32 to vector<1x256xi32>
    %12 = arith.cmpi ne, %10, %11 : vector<1x256xi32>
    %13 = vector.shape_cast %12 : vector<1x256xi1> to vector<1x256xi1>
    %14 = vector.broadcast %13 : vector<1x256xi1> to vector<8x256xi1>
    %15 = arith.select %14, %6, %4 : vector<8x256xi1>, vector<8x256xf32>
    %c254_i32 = arith.constant 254 : i32
    %16 = tpu.dynamic_rotate %15 by %c254_i32 dim 1 : vector<8x256xf32>, i32 -> vector<8x256xf32>
    %c1_i32_5 = arith.constant 1 : i32
    %17 = vector.broadcast %c1_i32_5 : i32 to vector<1x256xi32>
    %18 = arith.shrsi %5, %17 : vector<1x256xi32>
    %c1_i32_6 = arith.constant 1 : i32
    %19 = vector.broadcast %c1_i32_6 : i32 to vector<1x256xi32>
    %20 = arith.andi %18, %19 : vector<1x256xi32>
    %c0_i32_7 = arith.constant 0 : i32
    %21 = vector.broadcast %c0_i32_7 : i32 to vector<1x256xi32>
    %22 = arith.cmpi ne, %20, %21 : vector<1x256xi32>
    %23 = vector.shape_cast %22 : vector<1x256xi1> to vector<1x256xi1>
    %24 = vector.broadcast %23 : vector<1x256xi1> to vector<8x256xi1>
    %25 = arith.select %24, %16, %15 : vector<8x256xi1>, vector<8x256xf32>
    %c252_i32 = arith.constant 252 : i32
    %26 = tpu.dynamic_rotate %25 by %c252_i32 dim 1 : vector<8x256xf32>, i32 -> vector<8x256xf32>
    %c2_i32 = arith.constant 2 : i32
    %27 = vector.broadcast %c2_i32 : i32 to vector<1x256xi32>
    %28 = arith.shrsi %5, %27 : vector<1x256xi32>
    %c1_i32_8 = arith.constant 1 : i32
    %29 = vector.broadcast %c1_i32_8 : i32 to vector<1x256xi32>
    %30 = arith.andi %28, %29 : vector<1x256xi32>
    %c0_i32_9 = arith.constant 0 : i32
    %31 = vector.broadcast %c0_i32_9 : i32 to vector<1x256xi32>
    %32 = arith.cmpi ne, %30, %31 : vector<1x256xi32>
    %33 = vector.shape_cast %32 : vector<1x256xi1> to vector<1x256xi1>
    %34 = vector.broadcast %33 : vector<1x256xi1> to vector<8x256xi1>
    %35 = arith.select %34, %26, %25 : vector<8x256xi1>, vector<8x256xf32>
    %c232_i32 = arith.constant 232 : i32
    %36 = tpu.dynamic_rotate %35 by %c232_i32 dim 1 : vector<8x256xf32>, i32 -> vector<8x256xf32>
    %c3_i32 = arith.constant 3 : i32
    %37 = vector.broadcast %c3_i32 : i32 to vector<1x256xi32>
    %38 = arith.shrsi %5, %37 : vector<1x256xi32>
    %c1_i32_10 = arith.constant 1 : i32
    %39 = vector.broadcast %c1_i32_10 : i32 to vector<1x256xi32>
    %40 = arith.andi %38, %39 : vector<1x256xi32>
    %c0_i32_11 = arith.constant 0 : i32
    %41 = vector.broadcast %c0_i32_11 : i32 to vector<1x256xi32>
    %42 = arith.cmpi ne, %40, %41 : vector<1x256xi32>
    %43 = vector.shape_cast %42 : vector<1x256xi1> to vector<1x256xi1>
    %44 = vector.broadcast %43 : vector<1x256xi1> to vector<8x256xi1>
    %45 = arith.select %44, %36, %35 : vector<8x256xi1>, vector<8x256xf32>
    %c208_i32 = arith.constant 208 : i32
    %46 = tpu.dynamic_rotate %45 by %c208_i32 dim 1 : vector<8x256xf32>, i32 -> vector<8x256xf32>
    %c4_i32 = arith.constant 4 : i32
    %47 = vector.broadcast %c4_i32 : i32 to vector<1x256xi32>
    %48 = arith.shrsi %5, %47 : vector<1x256xi32>
    %c1_i32_12 = arith.constant 1 : i32
    %49 = vector.broadcast %c1_i32_12 : i32 to vector<1x256xi32>
    %50 = arith.andi %48, %49 : vector<1x256xi32>
    %c0_i32_13 = arith.constant 0 : i32
    %51 = vector.broadcast %c0_i32_13 : i32 to vector<1x256xi32>
    %52 = arith.cmpi ne, %50, %51 : vector<1x256xi32>
    %53 = vector.shape_cast %52 : vector<1x256xi1> to vector<1x256xi1>
    %54 = vector.broadcast %53 : vector<1x256xi1> to vector<8x256xi1>
    %55 = arith.select %54, %46, %45 : vector<8x256xi1>, vector<8x256xf32>
    %c160_i32 = arith.constant 160 : i32
    %56 = tpu.dynamic_rotate %55 by %c160_i32 dim 1 : vector<8x256xf32>, i32 -> vector<8x256xf32>
    %c5_i32 = arith.constant 5 : i32
    %57 = vector.broadcast %c5_i32 : i32 to vector<1x256xi32>
    %58 = arith.shrsi %5, %57 : vector<1x256xi32>
    %c1_i32_14 = arith.constant 1 : i32
    %59 = vector.broadcast %c1_i32_14 : i32 to vector<1x256xi32>
    %60 = arith.andi %58, %59 : vector<1x256xi32>
    %c0_i32_15 = arith.constant 0 : i32
    %61 = vector.broadcast %c0_i32_15 : i32 to vector<1x256xi32>
    %62 = arith.cmpi ne, %60, %61 : vector<1x256xi32>
    %63 = vector.shape_cast %62 : vector<1x256xi1> to vector<1x256xi1>
    %64 = vector.broadcast %63 : vector<1x256xi1> to vector<8x256xi1>
    %65 = arith.select %64, %56, %55 : vector<8x256xi1>, vector<8x256xf32>
    %66 = vector.extract_strided_slice %65 {offsets = [0, 0], sizes = [8, 64], strides = [1, 1]} : vector<8x256xf32> to vector<8x64xf32>
    %c0_16 = arith.constant 0 : index
    %c0_17 = arith.constant 0 : index
    %67 = vector.load %arg3[%c0_16, %c0_17] : memref<8x64xf32, #tpu.memory_space<vmem>>, vector<8x64xf32>
    tpu.vector_store %arg3[%c0_16, %c0_17], %66 {strides = array<i32>} : memref<8x64xf32, #tpu.memory_space<vmem>>, vector<8x64xf32>,
    return
  }
  func.func @transform_0(%arg0: i32) -> (i32, i32) {
    %c0_i32 = arith.constant 0 : i32
    %c0_i32_0 = arith.constant 0 : i32
    return %arg0, %c0_i32 : i32, i32
  }
  func.func @transform_1(%arg0: i32) -> (i32, i32) {
    %c0_i32 = arith.constant 0 : i32
    %c0_i32_0 = arith.constant 0 : i32
    %c0_i32_1 = arith.constant 0 : i32
    return %c0_i32, %c0_i32_0 : i32, i32
  }
  func.func @transform_2(%arg0: i32) -> (i32, i32) {
    %c0_i32 = arith.constant 0 : i32
    %c0_i32_0 = arith.constant 0 : i32
    return %arg0, %c0_i32 : i32, i32
  }
}

</mosaic_0001>

<llo_original>
// kernel: tpu_custom_call.1
$region0: #{tpu_custom_call.1}
  #allocation0 [shape = 'u32[]', space=smem, size = 0x4, offset = 0x4, fixed_abs, tag = 'smem constant byte address 0x4 - core index']
  #allocation1 [shape = 'u32[144,128]{1,0:T(1,128)}', space=vmem, size = 0x12000, scoped, tag = 'internal scratch']
  %s0 = inlined_call_operand.hbm [shape: f32[8,256], index: 0, kind: input, shape index: {}]
  %s1 = inlined_call_operand.vmem [shape: s32[1,256], index: 1, kind: input, shape index: {}]
  %s2 = inlined_call_operand.hbm [shape: f32[8,64], index: 2, kind: output, shape index: {}]
  %s3 = sld [smem:[#allocation0]]
  $region22: #{tpu_custom_call.1} parent=0
    _
  %s5 = ssub.s32 1, %s3
  %s6 = scalar_select 0, %s5, %s3
  $region1: #{tpu_custom_call.1} parent=0
    #allocation2 [shape = 'u8[8192]{0}', space=vmem, size = 0x2000, scoped, tag = 'input window, operand 0, single buffered']
    #allocation3 [shape = 's32[1]{0}', space=sflag, size = 0x4, scoped, tag = 'scoped memory for tpu_custom_call.1']
    #allocation4 [shape = 's32[1]{0}', space=sflag, size = 0x4, scoped, tag = 'scoped memory for tpu_custom_call.1']
    #allocation5 [shape = 'u8[4096]{0}', space=vmem, size = 0x1000, scoped, tag = 'output window, operand 0, single buffered']
    %7 = vsyncpa [#allocation3], 0
    %8 = vsyncpa [#allocation4], 0
    // Predicated region
    $region2: #{tpu_custom_call.1} parent=1 // pred_check
      _
    $region3: #{tpu_custom_call.1} parent=1 // pred_check_branch
      %10 = sbr.rel (0) target = $region5
    $region4: #{tpu_custom_call.1} parent=1 // pred_region
      %s12 = ssub.s32 256, 256
      %13 = vsyncadd [#allocation3], %s12
      %s15 = sshll.u32 [#allocation2], 4
      %s16 = int_to_ptr.vmem [resolvable:$true] %s15
      %18 = dma.hbm_to_vmem [thread:$0]  %s0, 256, %s16, [#allocation3]
    $region5: #{tpu_custom_call.1} parent=1 // pred_fallthru
      _
    // Predicated region
    $region6: #{tpu_custom_call.1} parent=1 // pred_check
      _
    $region7: #{tpu_custom_call.1} parent=1 // pred_check_branch
      %20 = sbr.rel (0) target = $region9
    $region8: #{tpu_custom_call.1} parent=1 // pred_region
      _
    $region9: #{tpu_custom_call.1} parent=1 // pred_fallthru
      _
    // Predicated region
    $region10: #{tpu_custom_call.1} parent=1 // pred_check
      _
    $region11: #{tpu_custom_call.1} parent=1 // pred_check_branch
      %22 = sbr.rel (0) target = $region13
    $region12: #{tpu_custom_call.1} parent=1 // pred_region
      %23 = dma.done [#allocation3], 256
    $region13: #{tpu_custom_call.1} parent=1 // pred_fallthru
      _
    %v24 = vld [vmem:[#allocation2] sm:$0xff]
    %v25 = vld [vmem:[#allocation2 + $0x8] sm:$0xff]
    %26 = vrot.lane.b32.xlu0 %v24, 112
    %v27 = vpop.permute.xlu0 %26
    %28 = vrot.lane.b32.xlu0 %v25, 112
    %v29 = vpop.permute.xlu0 %28
    %v30 = vlaneseq
    %v31 = vand.u32 %v30, 127
    %vm32 = vcmp.lt.s32.totalorder %v31, 112
    %v33 = vsel %vm32, %v27, %v29
    %v34 = vsel %vm32, %v29, %v27
    %v35 = vmax.f32 %v24, %v33
    %v36 = vmax.f32 %v25, %v34
    %37 = vrot.lane.b32.xlu0 %v35, 127
    %v38 = vpop.permute.xlu0 %37
    %39 = vrot.lane.b32.xlu0 %v36, 127
    %v40 = vpop.permute.xlu0 %39
    %vm41 = vcmp.lt.s32.totalorder %v31, 127
    %v42 = vsel %vm41, %v38, %v40
    %v43 = vsel %vm41, %v40, %v38
    %v44 = vmax.f32 %v35, %v42
    %v45 = vmax.f32 %v36, %v43
    %v46 = vld [vmem:[%s1] sm:$0x3]
    %47 = vrot.lane.b32.xlu0 %v44, 127
    %v48 = vpop.permute.xlu0 %47
    %49 = vrot.lane.b32.xlu0 %v45, 127
    %v50 = vpop.permute.xlu0 %49
    %v51 = vsel %vm41, %v48, %v50
    %v52 = vsel %vm41, %v50, %v48
    %v53 = vand.u32 %v46, 1
    %vm54 = vcmp.ne.s32.totalorder %v53, 0
    %v55 = vsel %vm54, 1, 0
    %v56 = vlaneseq
    %v57 = vshrl.u32 %v56, 7
    %v58 = vsub.s32 0, %v57
    %v59 = vrot.slane %v55, %v58
    %v60 = vlaneseq
    %v61 = vshrl.u32 %v60, 7
    %v62 = vsub.s32 1, %v61
    %v63 = vrot.slane %v55, %v62
    %vm64 = vcmp.eq.s32.totalorder %v59, 1
    %vm65 = vcmp.eq.s32.totalorder %v63, 1
    %v66 = vsel %vm64, %v51, %v44
    %v67 = vsel %vm65, %v52, %v45
    %68 = vrot.lane.b32.xlu0 %v66, 126
    %v69 = vpop.permute.xlu0 %68
    %70 = vrot.lane.b32.xlu0 %v67, 126
    %v71 = vpop.permute.xlu0 %70
    %vm72 = vcmp.lt.s32.totalorder %v31, 126
    %v73 = vsel %vm72, %v69, %v71
    %v74 = vsel %vm72, %v71, %v69
    %v75 = vshra.s32 %v46, 1
    %v76 = vand.u32 %v75, 1
    %vm77 = vcmp.ne.s32.totalorder %v76, 0
    %v78 = vsel %vm77, 1, 0
    %v79 = vlaneseq
    %v80 = vshrl.u32 %v79, 7
    %v81 = vsub.s32 0, %v80
    %v82 = vrot.slane %v78, %v81
    %v83 = vlaneseq
    %v84 = vshrl.u32 %v83, 7
    %v85 = vsub.s32 1, %v84
    %v86 = vrot.slane %v78, %v85
    %vm87 = vcmp.eq.s32.totalorder %v82, 1
    %vm88 = vcmp.eq.s32.totalorder %v86, 1
    %v89 = vsel %vm87, %v73, %v66
    %v90 = vsel %vm88, %v74, %v67
    %91 = vrot.lane.b32.xlu0 %v89, 124
    %v92 = vpop.permute.xlu0 %91
    %93 = vrot.lane.b32.xlu0 %v90, 124
    %v94 = vpop.permute.xlu0 %93
    %vm95 = vcmp.lt.s32.totalorder %v31, 124
    %v96 = vsel %vm95, %v92, %v94
    %v97 = vsel %vm95, %v94, %v92
    %v98 = vshra.s32 %v46, 2
    %v99 = vand.u32 %v98, 1
    %vm100 = vcmp.ne.s32.totalorder %v99, 0
    %v101 = vsel %vm100, 1, 0
    %v102 = vlaneseq
    %v103 = vshrl.u32 %v102, 7
    %v104 = vsub.s32 0, %v103
    %v105 = vrot.slane %v101, %v104
    %v106 = vlaneseq
    %v107 = vshrl.u32 %v106, 7
    %v108 = vsub.s32 1, %v107
    %v109 = vrot.slane %v101, %v108
    %vm110 = vcmp.eq.s32.totalorder %v105, 1
    %vm111 = vcmp.eq.s32.totalorder %v109, 1
    %v112 = vsel %vm110, %v96, %v89
    %v113 = vsel %vm111, %v97, %v90
    %114 = vrot.lane.b32.xlu0 %v112, 104
    %v115 = vpop.permute.xlu0 %114
    %116 = vrot.lane.b32.xlu0 %v113, 104
    %v117 = vpop.permute.xlu0 %116
    %vm118 = vcmp.lt.s32.totalorder %v31, 104
    %v119 = vsel %vm118, %v115, %v117
    %v120 = vsel %vm118, %v117, %v115
    %v121 = vshra.s32 %v46, 3
    %v122 = vand.u32 %v121, 1
    %vm123 = vcmp.ne.s32.totalorder %v122, 0
    %v124 = vsel %vm123, 1, 0
    %v125 = vlaneseq
    %v126 = vshrl.u32 %v125, 7
    %v127 = vsub.s32 0, %v126
    %v128 = vrot.slane %v124, %v127
    %v129 = vlaneseq
    %v130 = vshrl.u32 %v129, 7
    %v131 = vsub.s32 1, %v130
    %v132 = vrot.slane %v124, %v131
    %vm133 = vcmp.eq.s32.totalorder %v128, 1
    %vm134 = vcmp.eq.s32.totalorder %v132, 1
    %v135 = vsel %vm133, %v119, %v112
    %v136 = vsel %vm134, %v120, %v113
    %137 = vrot.lane.b32.xlu0 %v135, 80
    %v138 = vpop.permute.xlu0 %137
    %139 = vrot.lane.b32.xlu0 %v136, 80
    %v140 = vpop.permute.xlu0 %139
    %vm141 = vcmp.lt.s32.totalorder %v31, 80
    %v142 = vsel %vm141, %v138, %v140
    %v143 = vsel %vm141, %v140, %v138
    %v144 = vshra.s32 %v46, 4
    %v145 = vand.u32 %v144, 1
    %vm146 = vcmp.ne.s32.totalorder %v145, 0
    %v147 = vsel %vm146, 1, 0
    %v148 = vlaneseq
    %v149 = vshrl.u32 %v148, 7
    %v150 = vsub.s32 0, %v149
    %v151 = vrot.slane %v147, %v150
    %v152 = vlaneseq
    %v153 = vshrl.u32 %v152, 7
    %v154 = vsub.s32 1, %v153
    %v155 = vrot.slane %v147, %v154
    %vm156 = vcmp.eq.s32.totalorder %v151, 1
    %vm157 = vcmp.eq.s32.totalorder %v155, 1
    %v158 = vsel %vm156, %v142, %v135
    %v159 = vsel %vm157, %v143, %v136
    %160 = vrot.lane.b32.xlu0 %v158, 32
    %v161 = vpop.permute.xlu0 %160
    %162 = vrot.lane.b32.xlu0 %v159, 32
    %v163 = vpop.permute.xlu0 %162
    %vm164 = vcmp.lt.s32.totalorder %v31, 32
    %v165 = vsel %vm164, %v161, %v163
    %v166 = vshra.s32 %v46, 5
    %v167 = vand.u32 %v166, 1
    %vm168 = vcmp.ne.s32.totalorder %v167, 0
    %v169 = vsel %vm168, 1, 0
    %v170 = vlaneseq
    %v171 = vshrl.u32 %v170, 7
    %v172 = vsub.s32 0, %v171
    %v173 = vrot.slane %v169, %v172
    %vm174 = vcmp.eq.s32.totalorder %v173, 1
    %v175 = vsel %vm174, %v165, %v158
    %vm176 = vcmask 523264
    %177 = vst.msk [vmem:[#allocation5] sm:$0xff] %vm176, %v175
    // Predicated region
    $region14: #{tpu_custom_call.1} parent=1 // pred_check
      _
    $region15: #{tpu_custom_call.1} parent=1 // pred_check_branch
      %179 = sbr.rel (0) target = $region17
    $region16: #{tpu_custom_call.1} parent=1 // pred_region
      %s181 = ssub.s32 128, 128
      %182 = vsyncadd [#allocation4], %s181
      %s184 = sshll.u32 [#allocation5], 4
      %s185 = int_to_ptr.vmem [resolvable:$true] %s184
      %187 = dma.vmem_to_hbm [thread:$0]  %s185, 128, %s2, [#allocation4]
    $region17: #{tpu_custom_call.1} parent=1 // pred_fallthru
      _
    // Predicated region
    $region18: #{tpu_custom_call.1} parent=1 // pred_check
      _
    $region19: #{tpu_custom_call.1} parent=1 // pred_check_branch
      %189 = sbr.rel (0) target = $region21
    $region20: #{tpu_custom_call.1} parent=1 // pred_region
      %190 = dma.done [#allocation4], 128
    $region21: #{tpu_custom_call.1} parent=1 // pred_fallthru
      _
    %191 = vsyncpa [#allocation3], 1
    %192 = vsyncpa [#allocation4], 1

</llo_original>
